<compile_context>
chip_gen: v7x
topology: tpu7x:2x2x1
jax: 0.10.0
libtpu: 0.0.40
codegen_flags: <defaults>
</compile_context>

<pallas_src>
import functools

import jax
import jax.numpy as jnp
from jax.experimental import pallas as pl
from jax.experimental.pallas import tpu as pltpu


# ------------------------------- slab layout --------------------------------- #

def _round_up(v, m):
    return (v + m - 1) // m * m


def _slab_layout(n_input, n_hidden, n_layers, n_pad):
    """Row offsets of every weight matrix inside the packed parameter slab."""
    H = n_hidden
    width = max(6 * H, H, n_pad)
    offs = {"layers": []}
    r = 0
    offs["w1"] = r
    r += _round_up(n_input, 8)
    for l in range(n_layers):
        in_dim = H if l == 0 else 2 * H
        offs["layers"].append(r)
        r += _round_up(in_dim, 8)
    offs["w2"] = r
    r += _round_up(2 * H, 8)
    rows = _round_up(r, 8)
    return offs, rows, width


# ------------------------------ fused kernel --------------------------------- #

def _fused_rnn_kernel(x_ref, w_ref, b_ref, out_ref, *, n_layers, H, n_input,
                      n_pad, offs):
    """One-shot fused forward for a batch tile.

    x_ref  : (Bt, n_input)  f32
    w_ref  : (rows, width)  packed weight slab (bf16 or f32 matmul operands)
    b_ref  : (8, width)     packed f32 biases: [b1 | layer biases... | b2]
    out_ref: (Bt, n_pad + 4*H*n_layers)  f32  = [y_pad | h slab | c slab]
    """
    mm_dtype = w_ref.dtype  # matmul operand dtype; elementwise math stays f32

    # ---- linear1 + relu  (unsqueeze(1) -> seq_len == 1, implicit) ---------- #
    w1 = w_ref[offs["w1"]:offs["w1"] + n_input, 0:H]
    cur = jnp.maximum(
        jnp.dot(x_ref[...].astype(mm_dtype), w1,
                preferred_element_type=jnp.float32) + b_ref[0:1, 0:H],
        0.0)                                                      # (Bt, H) f32

    # ---- n_layers x bidirectional single-step LSTM -------------------------- #
    # Fused per-layer weight columns: [i_f, i_b, g_f, g_b, o_f, o_b]
    # (forget gate dropped: c0 == 0  =>  f * c0 == 0 exactly).
    h_parts, c_parts = [], []
    for l in range(n_layers):
        in_dim = H if l == 0 else 2 * H
        r0 = offs["layers"][l]
        w = w_ref[r0:r0 + in_dim, 0:6 * H]                        # (in, 6H)
        gates = (jnp.dot(cur.astype(mm_dtype), w,
                         preferred_element_type=jnp.float32)
                 + b_ref[1 + l:2 + l, 0:6 * H])                   # (Bt, 6H) f32
        i = jax.nn.sigmoid(gates[:, 0 * H:2 * H])                 # (Bt, 2H) [fwd|bwd]
        g = jnp.tanh(gates[:, 2 * H:4 * H])
        o = jax.nn.sigmoid(gates[:, 4 * H:6 * H])
        c = i * g
        h = o * jnp.tanh(c)                                       # (Bt, 2H) [fwd|bwd]
        h_parts.append(h)
        c_parts.append(c)
        cur = h                                                   # next layer input

    # ---- linear2 + single merged lane-dense store --------------------------- #
    w2 = w_ref[offs["w2"]:offs["w2"] + 2 * H, 0:n_pad]
    y = (jnp.dot(cur.astype(mm_dtype), w2, preferred_element_type=jnp.float32)
         + b_ref[1 + n_layers:2 + n_layers, 0:n_pad])             # (Bt, n_pad)
    out_ref[...] = jnp.concatenate([y] + h_parts + c_parts,
                                   axis=-1).astype(out_ref.dtype)


# ----------------------------- parameter setup ------------------------------- #

def init_params(key, n_input, n_output, n_hidden, n_layers=2):
    """Deterministic synthetic parameters in PyTorch-native layout."""
    def uniform(key, shape, bound):
        return jax.random.uniform(key, shape, jnp.float32, -bound, bound)

    keys = jax.random.split(key, 4 + 8 * n_layers)
    k = iter(keys)

    b1 = 1.0 / jnp.sqrt(n_input)
    b2 = 1.0 / jnp.sqrt(2 * n_hidden)
    bh = 1.0 / jnp.sqrt(n_hidden)

    params = {
        # stored pre-transposed: (in_features, out_features)
        "w1_t": uniform(next(k), (n_input, n_hidden), b1),
        "b1": uniform(next(k), (n_hidden,), b1),
        "w2_t": uniform(next(k), (2 * n_hidden, n_output), b2),
        "b2": uniform(next(k), (n_output,), b2),
        "lstm": [],
    }
    for layer in range(n_layers):
        in_dim = n_hidden if layer == 0 else 2 * n_hidden
        dirs = []
        for _d in range(2):  # forward, backward
            wih_t = uniform(next(k), (in_dim, 4 * n_hidden), bh)
            whh_t = uniform(next(k), (n_hidden, 4 * n_hidden), bh)
            b_ih = uniform(next(k), (4 * n_hidden,), bh)
            b_hh = uniform(next(k), (4 * n_hidden,), bh)
            dirs.append((wih_t, whh_t, b_ih + b_hh))  # combined bias
        params["lstm"].append(dirs)
    return params


def pack_params(params, n_input, n_hidden, n_output, n_layers=2, *,
                matmul_dtype=jnp.bfloat16, lane_pad=128):
    """Pack PyTorch-native params into two HBM slabs (done once).

    Weight slab (matmul_dtype): rows = [w1 | layer0 | layer1 | ... | w2], each
    segment padded to a sublane multiple so the in-kernel slices are aligned.
    Bias slab stays f32 (elementwise adds are f32 on all chips, incl. v5e).
    """
    H = n_hidden
    n_pad = _round_up(max(n_output, 1), lane_pad)
    offs, rows, width = _slab_layout(n_input, H, n_layers, n_pad)

    w_slab = jnp.zeros((rows, width), jnp.float32)
    b_slab = jnp.zeros((_round_up(2 + n_layers, 8), width), jnp.float32)

    # linear1
    w_slab = w_slab.at[offs["w1"]:offs["w1"] + n_input, 0:H].set(params["w1_t"])
    b_slab = b_slab.at[0, 0:H].set(params["b1"])

    # LSTM layers: PyTorch gate column order in wih^T is [i, f, g, o]; drop f.
    for l, ((wih_f, _whh_f, bf), (wih_b, _whh_b, bb)) in enumerate(params["lstm"]):
        in_dim = H if l == 0 else 2 * H
        w = jnp.concatenate(
            [wih_f[:, 0 * H:1 * H], wih_b[:, 0 * H:1 * H],   # i_fwd, i_bwd
             wih_f[:, 2 * H:3 * H], wih_b[:, 2 * H:3 * H],   # g_fwd, g_bwd
             wih_f[:, 3 * H:4 * H], wih_b[:, 3 * H:4 * H]],  # o_fwd, o_bwd
            axis=1)                                           # (in_dim, 6H)
        b = jnp.concatenate(
            [bf[0 * H:1 * H], bb[0 * H:1 * H],
             bf[2 * H:3 * H], bb[2 * H:3 * H],
             bf[3 * H:4 * H], bb[3 * H:4 * H]], axis=0)       # (6H,)
        r0 = offs["layers"][l]
        w_slab = w_slab.at[r0:r0 + in_dim, 0:6 * H].set(w)
        b_slab = b_slab.at[1 + l, 0:6 * H].set(b)

    # linear2 (columns lane-padded so the output store is unmasked)
    w_slab = w_slab.at[offs["w2"]:offs["w2"] + 2 * H, 0:n_output].set(params["w2_t"])
    b_slab = b_slab.at[1 + n_layers, 0:n_output].set(params["b2"])

    return {"w_slab": w_slab.astype(matmul_dtype),  # matmul operands (bf16 default)
            "b_slab": b_slab}                       # biases stay f32


# ------------------------------- forward pass --------------------------------- #

@functools.partial(jax.jit,
                   static_argnames=("n_hidden", "n_output", "n_layers",
                                    "block_b", "state_layout"))
def rnn_forward(packed, x, *, n_hidden, n_output, n_layers=2,
                block_b=128, state_layout="torch"):
    """Equivalent of RNN.forward(x, h=None) in eval mode (single fused kernel).

    block_b: batch tile (multiple of 8). Weights are DMA'd once and stay
             VMEM-resident across batch tiles (constant index_map); the batch
             axis is marked "parallel" (v7x: sharded over both TensorCores).
    state_layout: "torch" -> h_n/c_n as (num_layers*2, B, H) (PyTorch layout);
                  "slab"  -> lane-dense (B, 2*H*num_layers) slabs (no extra
                             post-kernel transpose dispatch).
    """
    B, n_input = x.shape
    H = n_hidden
    n_pad = _round_up(max(n_output, 1), 128)
    offs, rows, width = _slab_layout(n_input, H, n_layers, n_pad)
    assert packed["w_slab"].shape == (rows, width), "packed slab / shape mismatch"
    out_w = n_pad + 4 * H * n_layers            # [y_pad | h slab | c slab]

    tile_b = B if B <= block_b else block_b
    grid = (pl.cdiv(B, tile_b),)

    flops = 2 * B * (n_input * H + H * 6 * H
                     + (n_layers - 1) * 2 * H * 6 * H + 2 * H * n_pad)
    transcendentals = B * n_layers * 8 * H
    bytes_accessed = (x.size * x.dtype.itemsize
                      + packed["w_slab"].size * packed["w_slab"].dtype.itemsize
                      + packed["b_slab"].size * packed["b_slab"].dtype.itemsize
                      + B * out_w * 4)

    out = pl.pallas_call(
        functools.partial(_fused_rnn_kernel, n_layers=n_layers, H=H,
                          n_input=n_input, n_pad=n_pad, offs=offs),
        grid=grid,
        in_specs=[
            pl.BlockSpec((tile_b, n_input), lambda i: (i, 0)),      # x streams
            pl.BlockSpec((rows, width), lambda i: (0, 0)),          # weights resident
            pl.BlockSpec(packed["b_slab"].shape, lambda i: (0, 0)), # biases resident
        ],
        out_specs=pl.BlockSpec((tile_b, out_w), lambda i: (i, 0)),
        out_shape=jax.ShapeDtypeStruct((B, out_w), jnp.float32),
        compiler_params=pltpu.CompilerParams(
            dimension_semantics=("parallel",)),
        cost_estimate=pl.CostEstimate(flops=flops,
                                      transcendentals=transcendentals,
                                      bytes_accessed=bytes_accessed),
    )(x, packed["w_slab"], packed["b_slab"])

    y = out[:, :n_output]                                           # (B, n_output)
    h_slab = out[:, n_pad:n_pad + 2 * H * n_layers]                 # (B, 2HL)
    c_slab = out[:, n_pad + 2 * H * n_layers:]                      # (B, 2HL)
    if state_layout == "slab":
        return y, (h_slab, c_slab)
    # PyTorch layout: (num_layers * num_directions, B, H),
    # slab order [l0_fwd | l0_bwd | l1_fwd | l1_bwd]
    h_n = h_slab.reshape(B, 2 * n_layers, H).transpose(1, 0, 2)
    c_n = c_slab.reshape(B, 2 * n_layers, H).transpose(1, 0, 2)
    return y, (h_n, c_n)


# ----------------------------- pure-JAX reference ------------------------------ #

def rnn_forward_ref(params, x, n_hidden):
    """Faithful per-direction LSTM-cell reference (keeps the zero-state terms)."""
    B = x.shape[0]
    H = n_hidden
    layer_in = jnp.maximum(x @ params["w1_t"] + params["b1"], 0.0)
    h0 = jnp.zeros((B, H), jnp.float32)
    c0 = jnp.zeros((B, H), jnp.float32)
    h_n, c_n = [], []
    for layer_params in params["lstm"]:
        outs = []
        for (wih_t, whh_t, b) in layer_params:
            gates = layer_in @ wih_t + h0 @ whh_t + b
            i = jax.nn.sigmoid(gates[:, 0 * H:1 * H])
            f = jax.nn.sigmoid(gates[:, 1 * H:2 * H])
            g = jnp.tanh(gates[:, 2 * H:3 * H])
            o = jax.nn.sigmoid(gates[:, 3 * H:4 * H])
            c_new = f * c0 + i * g
            h_new = o * jnp.tanh(c_new)
            outs.append(h_new)
            h_n.append(h_new)
            c_n.append(c_new)
        layer_in = jnp.concatenate(outs, axis=-1)
    y = layer_in @ params["w2_t"] + params["b2"]
    return y, (jnp.stack(h_n, 0), jnp.stack(c_n, 0))


# ------------------------------------ main ------------------------------------ #

if __name__ == "__main__":
    n_input, n_output, n_hidden, n_layers = 48, 16, 32, 2
    batch = 8

    key = jax.random.PRNGKey(0)
    k_param, k_x, k_x2 = jax.random.split(key, 3)
    params = init_params(k_param, n_input, n_output, n_hidden, n_layers)
    packed = pack_params(params, n_input, n_hidden, n_output, n_layers,
                         matmul_dtype=jnp.bfloat16)
    x = jax.random.normal(k_x, (batch, n_input), jnp.float32)

    # Single-tile path (grid == (1,), everything VMEM-resident).
    y, (h_n, c_n) = rnn_forward(packed, x, n_hidden=n_hidden,
                                n_output=n_output, n_layers=n_layers)
    jax.block_until_ready((y, h_n, c_n))

    y_ref, (h_ref, c_ref) = rnn_forward_ref(params, x, n_hidden)
    assert y.shape == (batch, n_output)
    assert h_n.shape == (2 * n_layers, batch, n_hidden)
    assert c_n.shape == (2 * n_layers, batch, n_hidden)
    # bf16 matmul operands / f32 accumulation vs full-f32 reference.
    assert jnp.allclose(y, y_ref, rtol=2e-2, atol=2e-2)
    assert jnp.allclose(h_n, h_ref, rtol=2e-2, atol=2e-2)
    assert jnp.allclose(c_n, c_ref, rtol=2e-2, atol=2e-2)

    # Batched / gridded path: weights DMA'd once, x streams over batch tiles.
    x_big = jax.random.normal(k_x2, (4 * batch, n_input), jnp.float32)
    y_b, (h_b, c_b) = rnn_forward(packed, x_big, n_hidden=n_hidden,
                                  n_output=n_output, n_layers=n_layers,
                                  block_b=16)
    jax.block_until_ready((y_b, h_b, c_b))
    y_bref, (h_bref, c_bref) = rnn_forward_ref(params, x_big, n_hidden)
    assert jnp.allclose(y_b, y_bref, rtol=2e-2, atol=2e-2)
    assert jnp.allclose(h_b, h_bref, rtol=2e-2, atol=2e-2)
    assert jnp.allclose(c_b, c_bref, rtol=2e-2, atol=2e-2)

    print("KERNEL_OK")
</pallas_src>

<mosaic_0001>
module attributes {stable_mosaic.version = 11 : i64} {
  func.func @_fused_rnn_kernel(%arg0: i32, %arg1: memref<8x48xf32, #tpu.memory_space<vmem>>, %arg2: memref<208x192xbf16, #tpu.memory_space<vmem>>, %arg3: memref<8x192xf32, #tpu.memory_space<vmem>>, %arg4: memref<8x384xf32, #tpu.memory_space<vmem>>) attributes {dimension_semantics = [#tpu.dimension_semantics<parallel>], iteration_bounds = array<i64: 1>, scalar_prefetch = 0 : i64, scratch_operands = 0 : i64, tpu.core_type = #tpu.core_type<tc>, window_params = [{transform_indices = @transform_0, window_bounds = array<i64: 8, 48>}, {pipeline_mode = #tpu.pipeline_mode<synchronous>, transform_indices = @transform_1, window_bounds = array<i64: 208, 192>}, {pipeline_mode = #tpu.pipeline_mode<synchronous>, transform_indices = @transform_2, window_bounds = array<i64: 8, 192>}, {transform_indices = @transform_3, window_bounds = array<i64: 8, 384>}]} {
    %c0 = arith.constant 0 : index
    %c0_0 = arith.constant 0 : index
    %0 = vector.load %arg2[%c0, %c0_0] : memref<208x192xbf16, #tpu.memory_space<vmem>>, vector<48x32xbf16>
    %c0_1 = arith.constant 0 : index
    %c0_2 = arith.constant 0 : index
    %1 = vector.load %arg1[%c0_1, %c0_2] : memref<8x48xf32, #tpu.memory_space<vmem>>, vector<8x48xf32>
    %2 = arith.truncf %1 : vector<8x48xf32> to vector<8x48xbf16>
    %cst = arith.constant dense<0.000000e+00> : vector<8x32xf32>
    %3 = tpu.matmul %2, %0, %cst {dimension_numbers = #tpu.dot_dimension_numbers<[1], [0], [0], [1], [0, 0, 1, 1], [], []>} : vector<8x48xbf16>, vector<48x32xbf16>, vector<8x32xf32> -> vector<8x32xf32>
    %c0_3 = arith.constant 0 : index
    %c0_4 = arith.constant 0 : index
    %4 = vector.load %arg3[%c0_3, %c0_4] : memref<8x192xf32, #tpu.memory_space<vmem>>, vector<1x32xf32>
    %5 = vector.broadcast %4 : vector<1x32xf32> to vector<8x32xf32>
    %6 = arith.addf %3, %5 : vector<8x32xf32>
    %cst_5 = arith.constant 0.000000e+00 : f32
    %7 = vector.broadcast %cst_5 : f32 to vector<8x32xf32>
    %8 = arith.maximumf %6, %7 : vector<8x32xf32>
    %c48 = arith.constant 48 : index
    %c0_6 = arith.constant 0 : index
    %9 = vector.load %arg2[%c48, %c0_6] : memref<208x192xbf16, #tpu.memory_space<vmem>>, vector<32x192xbf16>
    %10 = arith.truncf %8 : vector<8x32xf32> to vector<8x32xbf16>
    %cst_7 = arith.constant dense<0.000000e+00> : vector<8x192xf32>
    %11 = tpu.matmul %10, %9, %cst_7 {dimension_numbers = #tpu.dot_dimension_numbers<[1], [0], [0], [1], [0, 0, 1, 1], [], []>} : vector<8x32xbf16>, vector<32x192xbf16>, vector<8x192xf32> -> vector<8x192xf32>
    %c1 = arith.constant 1 : index
    %c0_8 = arith.constant 0 : index
    %12 = vector.load %arg3[%c1, %c0_8] : memref<8x192xf32, #tpu.memory_space<vmem>>, vector<1x192xf32>
    %13 = vector.broadcast %12 : vector<1x192xf32> to vector<8x192xf32>
    %14 = arith.addf %11, %13 : vector<8x192xf32>
    %15 = vector.extract_strided_slice %14 {offsets = [0, 0], sizes = [8, 64], strides = [1, 1]} : vector<8x192xf32> to vector<8x64xf32>
    %16 = arith.negf %15 : vector<8x64xf32>
    %17 = math.exp %16 : vector<8x64xf32>
    %cst_9 = arith.constant 1.000000e+00 : f32
    %18 = vector.broadcast %cst_9 : f32 to vector<8x64xf32>
    %19 = arith.addf %18, %17 : vector<8x64xf32>
    %20 = arith.divf %18, %19 : vector<8x64xf32>
    %21 = vector.extract_strided_slice %14 {offsets = [0, 64], sizes = [8, 64], strides = [1, 1]} : vector<8x192xf32> to vector<8x64xf32>
    %22 = math.tanh %21 : vector<8x64xf32>
    %23 = vector.extract_strided_slice %14 {offsets = [0, 128], sizes = [8, 64], strides = [1, 1]} : vector<8x192xf32> to vector<8x64xf32>
    %24 = arith.negf %23 : vector<8x64xf32>
    %25 = math.exp %24 : vector<8x64xf32>
    %cst_10 = arith.constant 1.000000e+00 : f32
    %26 = vector.broadcast %cst_10 : f32 to vector<8x64xf32>
    %27 = arith.addf %26, %25 : vector<8x64xf32>
    %28 = arith.divf %26, %27 : vector<8x64xf32>
    %29 = arith.mulf %20, %22 : vector<8x64xf32>
    %30 = math.tanh %29 : vector<8x64xf32>
    %31 = arith.mulf %28, %30 : vector<8x64xf32>
    %c80 = arith.constant 80 : index
    %c0_11 = arith.constant 0 : index
    %32 = vector.load %arg2[%c80, %c0_11] : memref<208x192xbf16, #tpu.memory_space<vmem>>, vector<64x192xbf16>
    %33 = arith.truncf %31 : vector<8x64xf32> to vector<8x64xbf16>
    %cst_12 = arith.constant dense<0.000000e+00> : vector<8x192xf32>
    %34 = tpu.matmul %33, %32, %cst_12 {dimension_numbers = #tpu.dot_dimension_numbers<[1], [0], [0], [1], [0, 0, 1, 1], [], []>} : vector<8x64xbf16>, vector<64x192xbf16>, vector<8x192xf32> -> vector<8x192xf32>
    %c2 = arith.constant 2 : index
    %c0_13 = arith.constant 0 : index
    %35 = vector.load %arg3[%c2, %c0_13] : memref<8x192xf32, #tpu.memory_space<vmem>>, vector<1x192xf32>
    %36 = vector.broadcast %35 : vector<1x192xf32> to vector<8x192xf32>
    %37 = arith.addf %34, %36 : vector<8x192xf32>
    %38 = vector.extract_strided_slice %37 {offsets = [0, 0], sizes = [8, 64], strides = [1, 1]} : vector<8x192xf32> to vector<8x64xf32>
    %39 = arith.negf %38 : vector<8x64xf32>
    %40 = math.exp %39 : vector<8x64xf32>
    %cst_14 = arith.constant 1.000000e+00 : f32
    %41 = vector.broadcast %cst_14 : f32 to vector<8x64xf32>
    %42 = arith.addf %41, %40 : vector<8x64xf32>
    %43 = arith.divf %41, %42 : vector<8x64xf32>
    %44 = vector.extract_strided_slice %37 {offsets = [0, 64], sizes = [8, 64], strides = [1, 1]} : vector<8x192xf32> to vector<8x64xf32>
    %45 = math.tanh %44 : vector<8x64xf32>
    %46 = vector.extract_strided_slice %37 {offsets = [0, 128], sizes = [8, 64], strides = [1, 1]} : vector<8x192xf32> to vector<8x64xf32>
    %47 = arith.negf %46 : vector<8x64xf32>
    %48 = math.exp %47 : vector<8x64xf32>
    %cst_15 = arith.constant 1.000000e+00 : f32
    %49 = vector.broadcast %cst_15 : f32 to vector<8x64xf32>
    %50 = arith.addf %49, %48 : vector<8x64xf32>
    %51 = arith.divf %49, %50 : vector<8x64xf32>
    %52 = arith.mulf %43, %45 : vector<8x64xf32>
    %53 = math.tanh %52 : vector<8x64xf32>
    %54 = arith.mulf %51, %53 : vector<8x64xf32>
    %c144 = arith.constant 144 : index
    %c0_16 = arith.constant 0 : index
    %55 = vector.load %arg2[%c144, %c0_16] : memref<208x192xbf16, #tpu.memory_space<vmem>>, vector<64x128xbf16>
    %56 = arith.truncf %54 : vector<8x64xf32> to vector<8x64xbf16>
    %cst_17 = arith.constant dense<0.000000e+00> : vector<8x128xf32>
    %57 = tpu.matmul %56, %55, %cst_17 {dimension_numbers = #tpu.dot_dimension_numbers<[1], [0], [0], [1], [0, 0, 1, 1], [], []>} : vector<8x64xbf16>, vector<64x128xbf16>, vector<8x128xf32> -> vector<8x128xf32>
    %c3 = arith.constant 3 : index
    %c0_18 = arith.constant 0 : index
    %58 = vector.load %arg3[%c3, %c0_18] : memref<8x192xf32, #tpu.memory_space<vmem>>, vector<1x128xf32>
    %59 = vector.broadcast %58 : vector<1x128xf32> to vector<8x128xf32>
    %60 = arith.addf %57, %59 : vector<8x128xf32>
    %61 = tpu.concatenate %60, %31, %54, %29, %52 in 1 : vector<8x128xf32>, vector<8x64xf32>, vector<8x64xf32>, vector<8x64xf32>, vector<8x64xf32> -> vector<8x384xf32>
    %c0_19 = arith.constant 0 : index
    %c0_20 = arith.constant 0 : index
    %62 = vector.load %arg4[%c0_19, %c0_20] : memref<8x384xf32, #tpu.memory_space<vmem>>, vector<8x384xf32>
    tpu.vector_store %arg4[%c0_19, %c0_20], %61 {strides = array<i32>} : memref<8x384xf32, #tpu.memory_space<vmem>>, vector<8x384xf32>,
    return
  }
  func.func @transform_0(%arg0: i32) -> (i32, i32) {
    %c0_i32 = arith.constant 0 : i32
    %c0_i32_0 = arith.constant 0 : i32
    return %arg0, %c0_i32 : i32, i32
  }
  func.func @transform_1(%arg0: i32) -> (i32, i32) {
    %c0_i32 = arith.constant 0 : i32
    %c0_i32_0 = arith.constant 0 : i32
    %c0_i32_1 = arith.constant 0 : i32
    return %c0_i32, %c0_i32_0 : i32, i32
  }
  func.func @transform_2(%arg0: i32) -> (i32, i32) {
    %c0_i32 = arith.constant 0 : i32
    %c0_i32_0 = arith.constant 0 : i32
    %c0_i32_1 = arith.constant 0 : i32
    return %c0_i32, %c0_i32_0 : i32, i32
  }
  func.func @transform_3(%arg0: i32) -> (i32, i32) {
    %c0_i32 = arith.constant 0 : i32
    %c0_i32_0 = arith.constant 0 : i32
    return %arg0, %c0_i32 : i32, i32
  }
}

</mosaic_0001>

<llo_original>
// kernel: rnn_forward.1
$region0: #{rnn_forward.1}
  #allocation0 [shape = 'u32[]', space=smem, size = 0x4, offset = 0x4, fixed_abs, tag = 'smem constant byte address 0x4 - core index']
  #allocation1 [shape = 'u32[144,128]{1,0:T(1,128)}', space=vmem, size = 0x12000, scoped, tag = 'internal scratch']
  %s0 = inlined_call_operand.vmem [shape: f32[8,48], index: 0, kind: input, shape index: {}]
  %s1 = inlined_call_operand.vmem [shape: bf16[208,192], index: 1, kind: input, shape index: {}]
  %s2 = inlined_call_operand.vmem [shape: f32[8,192], index: 2, kind: input, shape index: {}]
  %s3 = inlined_call_operand.vmem [shape: f32[8,384], index: 3, kind: output, shape index: {}]
  %s4 = sld [smem:[#allocation0]]
  $region22: #{rnn_forward.1} parent=0
    _
  %s6 = ssub.s32 1, %s4
  %s7 = scalar_select 0, %s6, %s4
  // Predicated region
  $region2: #{rnn_forward.1} parent=0 // pred_check
    _
  $region3: #{rnn_forward.1} parent=0 // pred_check_branch
    %9 = sbr.rel (0) target = $region5
  $region4: #{rnn_forward.1} parent=0 // pred_region
    _
  $region5: #{rnn_forward.1} parent=0 // pred_fallthru
    _
  // Predicated region
  $region6: #{rnn_forward.1} parent=0 // pred_check
    _
  $region7: #{rnn_forward.1} parent=0 // pred_check_branch
    %11 = sbr.rel (0) target = $region9
  $region8: #{rnn_forward.1} parent=0 // pred_region
    _
  $region9: #{rnn_forward.1} parent=0 // pred_fallthru
    _
  // Predicated region
  $region10: #{rnn_forward.1} parent=0 // pred_check
    _
  $region11: #{rnn_forward.1} parent=0 // pred_check_branch
    %13 = sbr.rel (0) target = $region13
  $region12: #{rnn_forward.1} parent=0 // pred_region
    _
  $region13: #{rnn_forward.1} parent=0 // pred_fallthru
    _
  %v15 = vld [vmem:[%s1] sm:$0xf]
  %v16 = vld [vmem:[%s1 + $0x8] sm:$0xf]
  %v17 = vld [vmem:[%s1 + $0x10] sm:$0xf]
  %v18 = vld [vmem:[%s1 + $0x18] sm:$0xf]
  %v19 = vld [vmem:[%s1 + $0x20] sm:$0xf]
  %v20 = vld [vmem:[%s1 + $0x28] sm:$0xf]
  %v21 = vld [vmem:[%s0] sm:$0xff]
  %v22 = vpack.c.bf16 %v21, %v21
  %v23 = vld [vmem:[%s2] ss:$0 sm:$0xff]
  %v30 = vunpack.c.l.b16 %v15
  %v31 = vunpack.c.l.b16 %v16
  %v32 = vunpack.c.l.b16 %v17
  %v33 = vunpack.c.l.b16 %v18
  %v34 = vunpack.c.l.b16 %v19
  %v35 = vunpack.c.l.b16 %v20
  %v36 = vpack.c.b16 %v31, %v30
  %v37 = vpack.c.b16 %v33, %v32
  %v38 = vpack.c.b16 %v35, %v34
  %vm42 = vcmask 392192
  %v44 = vsel %vm42, %v22, 0
  %46 = vmatprep.subr.bf16.mxu0 0
  %47 = vmatpush1.bf16.msra.mxu0 %v36
  %48 = vmatprep.subr.bf16.mxu0 0
  %49 = vmatpush1.bf16.msra.mxu0 %v37
  %50 = vmatprep.subr.bf16.mxu0 0
  %51 = vmatpush1.bf16.msra.mxu0 %v38
  %52 = vmatprep.subr.bf16.mxu0 0
  %53 = vmatpush1.bf16.msra.mxu0 0
  %54 = vmatprep.subr.bf16.mxu0 0
  %55 = vmatpush1.bf16.msra.mxu0 0
  %56 = vmatprep.subr.bf16.mxu0 0
  %57 = vmatpush1.bf16.msra.mxu0 0
  %58 = vmatprep.subr.bf16.mxu0 0
  %59 = vmatpush1.bf16.msra.mxu0 0
  %60 = vmatprep.subr.bf16.mxu0 0
  %61 = vmatpush1.bf16.msra.mxu0 0
  %62 = vmatprep.subr.bf16.mxu0 0
  %63 = vmatpush1.bf16.msra.mxu0 0
  %64 = vmatprep.subr.bf16.mxu0 0
  %65 = vmatpush1.bf16.msra.mxu0 0
  %66 = vmatprep.subr.bf16.mxu0 0
  %67 = vmatpush1.bf16.msra.mxu0 0
  %68 = vmatprep.subr.bf16.mxu0 0
  %69 = vmatpush1.bf16.msra.mxu0 0
  %70 = vmatprep.subr.bf16.mxu0 0
  %71 = vmatpush1.bf16.msra.mxu0 0
  %72 = vmatprep.subr.bf16.mxu0 0
  %73 = vmatpush1.bf16.msra.mxu0 0
  %74 = vmatprep.subr.bf16.mxu0 0
  %75 = vmatpush1.bf16.msra.mxu0 0
  %76 = vmatprep.subr.bf16.mxu0 0
  %77 = vmatpush1.bf16.msra.mxu0 0
  %78 = vmatprep.mubr.bf16.mxu0 0
  %79 = vmatmul.mubr.bf16.gmra.mrb[0].mxu0 %v44
  %v80 = vpop.f32.mrb[0].mxu0
  %v81 = vadd.f32 %v23, %v80
  %v82 = vpop.f32.mrb[0].mxu0
  %v83 = vpop.f32.mrb[0].mxu0
  %v84 = vpop.f32.mrb[0].mxu0
  %85 = vdwg.mxu0
  %v86 = vmax.f32 %v81, 0.0
  %v87 = vld [vmem:[%s1 + $0x30] sm:$0xff]
  %v88 = vld [vmem:[%s1 + $0x38] sm:$0xff]
  %v89 = vld [vmem:[%s1 + $0x40] sm:$0xff]
  %v90 = vld [vmem:[%s1 + $0x48] sm:$0xff]
  %v91 = vpack.c.bf16 %v86, %v86
  %s92 = scalar_lea.vmem %s2, 1
  %v93 = vld [vmem:[%s92] ss:$8 sm:$0x3]
  %v95 = vlaneseq
  %v96 = vshrl.u32 %v95, 7
  %v97 = vsub.s32 0, %v96
  %v98 = vrot.slane %v93, %v97
  %v99 = vlaneseq
  %v100 = vshrl.u32 %v99, 7
  %v101 = vsub.s32 1, %v100
  %v102 = vrot.slane %v93, %v101
  %v109 = vunpack.c.l.b16 %v87
  %v110 = vunpack.c.h.b16 %v87
  %v111 = vunpack.c.l.b16 %v88
  %v112 = vunpack.c.h.b16 %v88
  %v113 = vunpack.c.l.b16 %v89
  %v114 = vunpack.c.h.b16 %v89
  %v115 = vunpack.c.l.b16 %v90
  %v116 = vunpack.c.h.b16 %v90
  %v117 = vpack.c.b16 %v111, %v109
  %v118 = vpack.c.b16 %v112, %v110
  %v119 = vpack.c.b16 %v115, %v113
  %v120 = vpack.c.b16 %v116, %v114
  %vm125 = vcmask 261120
  %v127 = vsel %vm125, %v91, 0
  %129 = vmatprep.subr.bf16.mxu0 %v118
  %130 = vmatpush1.bf16.msra.mxu0 %v117
  %131 = vmatprep.subr.bf16.mxu0 %v120
  %132 = vmatpush1.bf16.msra.mxu0 %v119
  %133 = vmatprep.subr.bf16.mxu0 0
  %134 = vmatpush1.bf16.msra.mxu0 0
  %135 = vmatprep.subr.bf16.mxu0 0
  %136 = vmatpush1.bf16.msra.mxu0 0
  %137 = vmatprep.subr.bf16.mxu0 0
  %138 = vmatpush1.bf16.msra.mxu0 0
  %139 = vmatprep.subr.bf16.mxu0 0
  %140 = vmatpush1.bf16.msra.mxu0 0
  %141 = vmatprep.subr.bf16.mxu0 0
  %142 = vmatpush1.bf16.msra.mxu0 0
  %143 = vmatprep.subr.bf16.mxu0 0
  %144 = vmatpush1.bf16.msra.mxu0 0
  %145 = vmatprep.subr.bf16.mxu0 0
  %146 = vmatpush1.bf16.msra.mxu0 0
  %147 = vmatprep.subr.bf16.mxu0 0
  %148 = vmatpush1.bf16.msra.mxu0 0
  %149 = vmatprep.subr.bf16.mxu0 0
  %150 = vmatpush1.bf16.msra.mxu0 0
  %151 = vmatprep.subr.bf16.mxu0 0
  %152 = vmatpush1.bf16.msra.mxu0 0
  %153 = vmatprep.subr.bf16.mxu0 0
  %154 = vmatpush1.bf16.msra.mxu0 0
  %155 = vmatprep.subr.bf16.mxu0 0
  %156 = vmatpush1.bf16.msra.mxu0 0
  %157 = vmatprep.subr.bf16.mxu0 0
  %158 = vmatpush1.bf16.msra.mxu0 0
  %159 = vmatprep.subr.bf16.mxu0 0
  %160 = vmatpush1.bf16.msra.mxu0 0
  %161 = vmatprep.mubr.bf16.mxu0 0
  %162 = vmatmul.mubr.bf16.gmra.mrb[0].mxu0 %v127
  %v163 = vpop.f32.mrb[0].mxu0
  %v164 = vadd.f32 %v98, %v163
  %v165 = vpop.f32.mrb[0].mxu0
  %v166 = vadd.f32 %v102, %v165
  %v167 = vpop.f32.mrb[0].mxu0
  %v168 = vpop.f32.mrb[0].mxu0
  %169 = vdwg.mxu0
  %v170 = vxor.u32 %v164, 2147483648
  %v171 = vmul.f32 %v170, 1.442695
  %v172 = vpow.pop %v171
  %v173 = vadd.f32 %v172, 1.0
  %v174 = vrcp.pop %v173
  %v175 = vmul.f32 1.0, %v174
  %v176 = vtanh.pop %v164
  %v177 = vxor.u32 %v166, 2147483648
  %v178 = vmul.f32 %v177, 1.442695
  %v179 = vpow.pop %v178
  %v180 = vadd.f32 %v179, 1.0
  %v181 = vrcp.pop %v180
  %v182 = vmul.f32 1.0, %v181
  %184 = vrot.lane.b32.xlu0 %v176, 64
  %v185 = vpop.permute.xlu0 %184
  %v187 = vmul.f32 %v175, %v185
  %v188 = vtanh.pop %v187
  %v189 = vmul.f32 %v182, %v188
  %v190 = vld [vmem:[%s1 + $0x50] sm:$0xff]
  %v191 = vld [vmem:[%s1 + $0x58] sm:$0xff]
  %v192 = vld [vmem:[%s1 + $0x60] sm:$0xff]
  %v193 = vld [vmem:[%s1 + $0x68] sm:$0xff]
  %v194 = vld [vmem:[%s1 + $0x70] sm:$0xff]
  %v195 = vld [vmem:[%s1 + $0x78] sm:$0xff]
  %v196 = vld [vmem:[%s1 + $0x80] sm:$0xff]
  %v197 = vld [vmem:[%s1 + $0x88] sm:$0xff]
  %v198 = vpack.c.bf16 %v189, %v189
  %s199 = scalar_lea.vmem %s2, 2
  %v200 = vld [vmem:[%s199] ss:$8 sm:$0x3]
  %v202 = vlaneseq
  %v203 = vshrl.u32 %v202, 7
  %v204 = vsub.s32 0, %v203
  %v205 = vrot.slane %v200, %v204
  %v206 = vlaneseq
  %v207 = vshrl.u32 %v206, 7
  %v208 = vsub.s32 1, %v207
  %v209 = vrot.slane %v200, %v208
  %v220 = vunpack.c.l.b16 %v190
  %v221 = vunpack.c.h.b16 %v190
  %v222 = vunpack.c.l.b16 %v191
  %v223 = vunpack.c.h.b16 %v191
  %v224 = vunpack.c.l.b16 %v192
  %v225 = vunpack.c.h.b16 %v192
  %v226 = vunpack.c.l.b16 %v193
  %v227 = vunpack.c.h.b16 %v193
  %v228 = vunpack.c.l.b16 %v194
  %v229 = vunpack.c.h.b16 %v194
  %v230 = vunpack.c.l.b16 %v195
  %v231 = vunpack.c.h.b16 %v195
  %v232 = vunpack.c.l.b16 %v196
  %v233 = vunpack.c.h.b16 %v196
  %v234 = vunpack.c.l.b16 %v197
  %v235 = vunpack.c.h.b16 %v197
  %v236 = vpack.c.b16 %v222, %v220
  %v237 = vpack.c.b16 %v223, %v221
  %v238 = vpack.c.b16 %v226, %v224
  %v239 = vpack.c.b16 %v227, %v225
  %v240 = vpack.c.b16 %v230, %v228
  %v241 = vpack.c.b16 %v231, %v229
  %v242 = vpack.c.b16 %v234, %v232
  %v243 = vpack.c.b16 %v235, %v233
  %vm252 = vcmask 523264
  %v254 = vsel %vm252, %v198, 0
  %256 = vmatprep.subr.bf16.mxu0 %v237
  %257 = vmatpush1.bf16.msra.mxu0 %v236
  %258 = vmatprep.subr.bf16.mxu0 %v239
  %259 = vmatpush1.bf16.msra.mxu0 %v238
  %260 = vmatprep.subr.bf16.mxu0 %v241
  %261 = vmatpush1.bf16.msra.mxu0 %v240
  %262 = vmatprep.subr.bf16.mxu0 %v243
  %263 = vmatpush1.bf16.msra.mxu0 %v242
  %264 = vmatprep.subr.bf16.mxu0 0
  %265 = vmatpush1.bf16.msra.mxu0 0
  %266 = vmatprep.subr.bf16.mxu0 0
  %267 = vmatpush1.bf16.msra.mxu0 0
  %268 = vmatprep.subr.bf16.mxu0 0
  %269 = vmatpush1.bf16.msra.mxu0 0
  %270 = vmatprep.subr.bf16.mxu0 0
  %271 = vmatpush1.bf16.msra.mxu0 0
  %272 = vmatprep.subr.bf16.mxu0 0
  %273 = vmatpush1.bf16.msra.mxu0 0
  %274 = vmatprep.subr.bf16.mxu0 0
  %275 = vmatpush1.bf16.msra.mxu0 0
  %276 = vmatprep.subr.bf16.mxu0 0
  %277 = vmatpush1.bf16.msra.mxu0 0
  %278 = vmatprep.subr.bf16.mxu0 0
  %279 = vmatpush1.bf16.msra.mxu0 0
  %280 = vmatprep.subr.bf16.mxu0 0
  %281 = vmatpush1.bf16.msra.mxu0 0
  %282 = vmatprep.subr.bf16.mxu0 0
  %283 = vmatpush1.bf16.msra.mxu0 0
  %284 = vmatprep.subr.bf16.mxu0 0
  %285 = vmatpush1.bf16.msra.mxu0 0
  %286 = vmatprep.subr.bf16.mxu0 0
  %287 = vmatpush1.bf16.msra.mxu0 0
  %288 = vmatprep.mubr.bf16.mxu0 0
  %289 = vmatmul.mubr.bf16.gmra.mrb[0].mxu0 %v254
  %v290 = vpop.f32.mrb[0].mxu0
  %v291 = vadd.f32 %v205, %v290
  %v292 = vpop.f32.mrb[0].mxu0
  %v293 = vadd.f32 %v209, %v292
  %v294 = vpop.f32.mrb[0].mxu0
  %v295 = vpop.f32.mrb[0].mxu0
  %296 = vdwg.mxu0
  %v297 = vxor.u32 %v291, 2147483648
  %v298 = vmul.f32 %v297, 1.442695
  %v299 = vpow.pop %v298
  %v300 = vadd.f32 %v299, 1.0
  %v301 = vrcp.pop %v300
  %v302 = vmul.f32 1.0, %v301
  %v303 = vtanh.pop %v291
  %v304 = vxor.u32 %v293, 2147483648
  %v305 = vmul.f32 %v304, 1.442695
  %v306 = vpow.pop %v305
  %v307 = vadd.f32 %v306, 1.0
  %v308 = vrcp.pop %v307
  %v309 = vmul.f32 1.0, %v308
  %311 = vrot.lane.b32.xlu0 %v303, 64
  %v312 = vpop.permute.xlu0 %311
  %v314 = vmul.f32 %v302, %v312
  %v315 = vtanh.pop %v314
  %v316 = vmul.f32 %v309, %v315
  %v317 = vld [vmem:[%s1 + $0x90] sm:$0xf]
  %v318 = vld [vmem:[%s1 + $0x98] sm:$0xf]
  %v319 = vld [vmem:[%s1 + $0xa0] sm:$0xf]
  %v320 = vld [vmem:[%s1 + $0xa8] sm:$0xf]
  %v321 = vld [vmem:[%s1 + $0xb0] sm:$0xf]
  %v322 = vld [vmem:[%s1 + $0xb8] sm:$0xf]
  %v323 = vld [vmem:[%s1 + $0xc0] sm:$0xf]
  %v324 = vld [vmem:[%s1 + $0xc8] sm:$0xf]
  %v325 = vpack.c.bf16 %v316, %v316
  %v326 = vld [vmem:[%s2 + $0x3] ss:$0 sm:$0xff]
  %v335 = vunpack.c.l.b16 %v317
  %v336 = vunpack.c.l.b16 %v318
  %v337 = vunpack.c.l.b16 %v319
  %v338 = vunpack.c.l.b16 %v320
  %v339 = vunpack.c.l.b16 %v321
  %v340 = vunpack.c.l.b16 %v322
  %v341 = vunpack.c.l.b16 %v323
  %v342 = vunpack.c.l.b16 %v324
  %v343 = vpack.c.b16 %v336, %v335
  %v344 = vpack.c.b16 %v338, %v337
  %v345 = vpack.c.b16 %v340, %v339
  %v346 = vpack.c.b16 %v342, %v341
  %v352 = vsel %vm252, %v325, 0
  %354 = vmatprep.subr.bf16.mxu0 0
  %355 = vmatpush1.bf16.msra.mxu0 %v343
  %356 = vmatprep.subr.bf16.mxu0 0
  %357 = vmatpush1.bf16.msra.mxu0 %v344
  %358 = vmatprep.subr.bf16.mxu0 0
  %359 = vmatpush1.bf16.msra.mxu0 %v345
  %360 = vmatprep.subr.bf16.mxu0 0
  %361 = vmatpush1.bf16.msra.mxu0 %v346
  %362 = vmatprep.subr.bf16.mxu0 0
  %363 = vmatpush1.bf16.msra.mxu0 0
  %364 = vmatprep.subr.bf16.mxu0 0
  %365 = vmatpush1.bf16.msra.mxu0 0
  %366 = vmatprep.subr.bf16.mxu0 0
  %367 = vmatpush1.bf16.msra.mxu0 0
  %368 = vmatprep.subr.bf16.mxu0 0
  %369 = vmatpush1.bf16.msra.mxu0 0
  %370 = vmatprep.subr.bf16.mxu0 0
  %371 = vmatpush1.bf16.msra.mxu0 0
  %372 = vmatprep.subr.bf16.mxu0 0
  %373 = vmatpush1.bf16.msra.mxu0 0
  %374 = vmatprep.subr.bf16.mxu0 0
  %375 = vmatpush1.bf16.msra.mxu0 0
  %376 = vmatprep.subr.bf16.mxu0 0
  %377 = vmatpush1.bf16.msra.mxu0 0
  %378 = vmatprep.subr.bf16.mxu0 0
  %379 = vmatpush1.bf16.msra.mxu0 0
  %380 = vmatprep.subr.bf16.mxu0 0
  %381 = vmatpush1.bf16.msra.mxu0 0
  %382 = vmatprep.subr.bf16.mxu0 0
  %383 = vmatpush1.bf16.msra.mxu0 0
  %384 = vmatprep.subr.bf16.mxu0 0
  %385 = vmatpush1.bf16.msra.mxu0 0
  %386 = vmatprep.mubr.bf16.mxu0 0
  %387 = vmatmul.mubr.bf16.gmra.mrb[0].mxu0 %v352
  %v388 = vpop.f32.mrb[0].mxu0
  %v389 = vadd.f32 %v326, %v388
  %v390 = vpop.f32.mrb[0].mxu0
  %v391 = vpop.f32.mrb[0].mxu0
  %v392 = vpop.f32.mrb[0].mxu0
  %393 = vdwg.mxu0
  %395 = vrot.lane.b32.xlu0 %v316, 64
  %v396 = vpop.permute.xlu0 %395
  %399 = vrot.lane.b32.xlu0 %v314, 64
  %v400 = vpop.permute.xlu0 %399
  %v402 = vsel %vm252, %v189, %v396
  %v403 = vsel %vm252, %v187, %v400
  %404 = vst [vmem:[%s3] sm:$0xff] %v389
  %405 = vst [vmem:[%s3 + $0x8] sm:$0xff] %v402
  %406 = vst [vmem:[%s3 + $0x10] sm:$0xff] %v403
  // Predicated region
  $region14: #{rnn_forward.1} parent=0 // pred_check
    _
  $region15: #{rnn_forward.1} parent=0 // pred_check_branch
    %408 = sbr.rel (0) target = $region17
  $region16: #{rnn_forward.1} parent=0 // pred_region
    _
  $region17: #{rnn_forward.1} parent=0 // pred_fallthru
    _
  // Predicated region
  $region18: #{rnn_forward.1} parent=0 // pred_check
    _
  $region19: #{rnn_forward.1} parent=0 // pred_check_branch
    %410 = sbr.rel (0) target = $region21
  $region20: #{rnn_forward.1} parent=0 // pred_region
    _
  $region21: #{rnn_forward.1} parent=0 // pred_fallthru
    _

</llo_original>
